<compile_context>
chip_gen: v7x
topology: tpu7x:2x2x1
jax: 0.10.0
libtpu: 0.0.40
codegen_flags: <defaults>
</compile_context>

<pallas_src>
import jax
import jax.numpy as jnp
from jax.experimental import pallas as pl
from jax.experimental.pallas import tpu as pltpu


def malware_nn_kernel(x_ref, w1_ref, b1_ref, w2_ref, b2_ref, w3_ref, b3_ref, o_ref):
    """One batch tile: sigmoid(relu(relu(x@W1+b1)@W2+b2) . w3 + b3), lane-dense out."""
    # x streams in its original dtype; cast to bf16 in-kernel (VPU) for the MXU.
    x = x_ref[...].astype(jnp.bfloat16)                                 # (TB, D)

    # fc1 + ReLU   (dropout = identity in eval mode)
    h1 = jnp.dot(x, w1_ref[...], preferred_element_type=jnp.float32)   # (TB, 128) f32
    h1 = jnp.maximum(h1 + b1_ref[...], 0.0)

    # fc2 + ReLU
    h2 = jnp.dot(h1.astype(jnp.bfloat16), w2_ref[...],
                 preferred_element_type=jnp.float32)                    # (TB, 64) f32
    h2 = jnp.maximum(h2 + b2_ref[...], 0.0)

    # fc3 + Sigmoid.  w3 keeps the PyTorch (out, in) = (1, 64) layout and is
    # contracted against h2's feature axis so the tile result lands as a
    # lane-dense (1, TB) row -> unmasked stores, no N=1 output-column MXU pass.
    logits = jax.lax.dot_general(
        w3_ref[...], h2.astype(jnp.bfloat16),
        dimension_numbers=(((1,), (1,)), ((), ())),
        preferred_element_type=jnp.float32)                             # (1, TB)
    logits = logits + b3_ref[0, 0]                                      # SMEM scalar
    o_ref[...] = pl.reciprocal(1.0 + jnp.exp(-logits))                  # exact


def malware_nn_forward(x, params, *, tile_b=4096):
    """Run the fused MLP kernel. x: (B, input_dim) float32 -> (B, 1) float32."""
    w1, b1, w2, b2, w3, b3 = params
    B, D = x.shape

    # --- Batch tile selection -------------------------------------------------
    # Multiple of 128 (lane-dense (1, TB) output row); large enough to amortize
    # per-grid-step overhead, but capped so the grid keeps >= 2 tiles whenever
    # the batch allows it (megacore sharding on v7x; harmless on v5e/v6e).
    tile_b = max(128, (tile_b // 128) * 128)
    b_ceil = 128 * pl.cdiv(B, 128)
    if b_ceil > 128:
        tb_two_tiles = 128 * pl.cdiv(pl.cdiv(B, 2), 128)
        TB = min(tile_b, tb_two_tiles)
    else:
        TB = 128
    n_tiles = pl.cdiv(B, TB)
    B_pad = n_tiles * TB   # padded output width; ragged x tail handled by Pallas

    # Small, one-time casts of the VMEM-resident weights to bf16.
    w1_b = w1.astype(jnp.bfloat16)
    w2_b = w2.astype(jnp.bfloat16)
    w3_b = w3.astype(jnp.bfloat16)

    itemsize = jnp.dtype(x.dtype).itemsize
    # VMEM budget: double-buffered x/out tiles + f32 h1/h2 temporaries + weights.
    est_vmem = (2 * TB * D * itemsize            # x tiles (double-buffered)
                + 2 * TB * (128 + 64) * 4        # h1/h2 f32 temporaries (+slack)
                + 2 * TB * 4                     # out tiles (double-buffered)
                + (w1_b.size + w2_b.size + w3_b.size) * 2
                + (b1.size + b2.size) * 4)
    vmem_limit = int(min(max(est_vmem + (4 << 20), 16 << 20), 48 << 20))

    cost = pl.CostEstimate(
        flops=2 * B_pad * (D * 128 + 128 * 64 + 64),
        transcendentals=B_pad,
        bytes_accessed=(x.size * itemsize
                        + (w1_b.size + w2_b.size + w3_b.size) * 2
                        + (b1.size + b2.size + b3.size) * 4
                        + B_pad * 4),
    )

    out = pl.pallas_call(
        malware_nn_kernel,
        out_shape=jax.ShapeDtypeStruct((1, B_pad), jnp.float32),
        grid=(n_tiles,),
        in_specs=[
            pl.BlockSpec((TB, D), lambda i: (i, 0)),             # x tile (streamed)
            pl.BlockSpec((D, 128), lambda i: (0, 0)),            # w1 (VMEM-resident)
            pl.BlockSpec((1, 128), lambda i: (0, 0)),            # b1
            pl.BlockSpec((128, 64), lambda i: (0, 0)),           # w2
            pl.BlockSpec((1, 64), lambda i: (0, 0)),             # b2
            pl.BlockSpec((1, 64), lambda i: (0, 0)),             # w3 (PyTorch layout)
            pl.BlockSpec(memory_space=pltpu.MemorySpace.SMEM),   # b3 scalar
        ],
        out_specs=pl.BlockSpec((1, TB), lambda i: (0, i)),
        compiler_params=pltpu.CompilerParams(
            dimension_semantics=("parallel",),
            vmem_limit_bytes=vmem_limit),
        cost_estimate=cost,
    )(x, w1_b, b1, w2_b, b2, w3_b, b3)

    return out[0, :B][:, None]


def init_params(input_dim, key):
    """Deterministic parameter init mimicking nn.Linear shapes.

    fc1/fc2 are stored transposed vs. PyTorch, i.e. (in, out), so the kernel
    computes x @ W directly; fc3 keeps the PyTorch (out, in) = (1, 64) layout.
    """
    k1, k2, k3, k4, k5, k6 = jax.random.split(key, 6)

    def uniform(k, shape, fan_in):
        bound = 1.0 / jnp.sqrt(fan_in)
        return jax.random.uniform(k, shape, jnp.float32, -bound, bound)

    w1 = uniform(k1, (input_dim, 128), input_dim)
    b1 = uniform(k2, (1, 128), input_dim)
    w2 = uniform(k3, (128, 64), 128)
    b2 = uniform(k4, (1, 64), 128)
    w3 = uniform(k5, (1, 64), 64)      # PyTorch (out, in)
    b3 = uniform(k6, (1, 1), 64)
    return (w1, b1, w2, b2, w3, b3)


def _reference(x, params):
    """Pure-JAX reference using the same bf16 casts the kernel applies."""
    w1, b1, w2, b2, w3, b3 = params
    h1 = jnp.maximum(
        jnp.dot(x.astype(jnp.bfloat16), w1.astype(jnp.bfloat16),
                preferred_element_type=jnp.float32) + b1, 0.0)
    h2 = jnp.maximum(
        jnp.dot(h1.astype(jnp.bfloat16), w2.astype(jnp.bfloat16),
                preferred_element_type=jnp.float32) + b2, 0.0)
    logits = jnp.dot(h2.astype(jnp.bfloat16), w3.astype(jnp.bfloat16).T,
                     preferred_element_type=jnp.float32) + b3
    return jax.nn.sigmoid(logits)


if __name__ == "__main__":
    key = jax.random.PRNGKey(0)
    k_x, k_x2, k_p = jax.random.split(key, 3)

    input_dim = 32
    params = init_params(input_dim, k_p)

    # Small batch (single partial tile).
    batch = 8
    x = jax.random.normal(k_x, (batch, input_dim), dtype=jnp.float32)
    out = jax.block_until_ready(malware_nn_forward(x, params))
    ref = _reference(x, params)
    assert out.shape == (batch, 1)
    assert jnp.allclose(out, ref, atol=5e-3), "mismatch vs reference (batch=8)"

    # Multi-tile grid with a ragged last tile (exercises partial-block path).
    batch2 = 300
    x2 = jax.random.normal(k_x2, (batch2, input_dim), dtype=jnp.float32)
    out2 = jax.block_until_ready(malware_nn_forward(x2, params))
    ref2 = _reference(x2, params)
    assert out2.shape == (batch2, 1)
    assert jnp.allclose(out2, ref2, atol=5e-3), "mismatch vs reference (batch=300)"

    print("KERNEL_OK")
</pallas_src>

<mosaic_0001>
module attributes {stable_mosaic.version = 11 : i64} {
  func.func @malware_nn_kernel(%arg0: i32, %arg1: memref<128x32xf32, #tpu.memory_space<vmem>>, %arg2: memref<32x128xbf16, #tpu.memory_space<vmem>>, %arg3: memref<1x128xf32, #tpu.memory_space<vmem>>, %arg4: memref<128x64xbf16, #tpu.memory_space<vmem>>, %arg5: memref<1x64xf32, #tpu.memory_space<vmem>>, %arg6: memref<1x64xbf16, #tpu.memory_space<vmem>>, %arg7: memref<1x1xf32, #tpu.memory_space<smem>>, %arg8: memref<1x128xf32, #tpu.memory_space<vmem>>) attributes {dimension_semantics = [#tpu.dimension_semantics<parallel>], iteration_bounds = array<i64: 1>, scalar_prefetch = 0 : i64, scratch_operands = 0 : i64, tpu.core_type = #tpu.core_type<tc>, window_params = [{transform_indices = @transform_0, window_bounds = array<i64: 128, 32>}, {pipeline_mode = #tpu.pipeline_mode<synchronous>, transform_indices = @transform_1, window_bounds = array<i64: 32, 128>}, {pipeline_mode = #tpu.pipeline_mode<synchronous>, transform_indices = @transform_2, window_bounds = array<i64: 1, 128>}, {pipeline_mode = #tpu.pipeline_mode<synchronous>, transform_indices = @transform_3, window_bounds = array<i64: 128, 64>}, {pipeline_mode = #tpu.pipeline_mode<synchronous>, transform_indices = @transform_4, window_bounds = array<i64: 1, 64>}, {pipeline_mode = #tpu.pipeline_mode<synchronous>, transform_indices = @transform_5, window_bounds = array<i64: 1, 64>}, {transform_indices = @transform_6, window_bounds = array<i64: 1, 1>}, {transform_indices = @transform_7, window_bounds = array<i64: 1, 128>}]} {
    %c0 = arith.constant 0 : index
    %c0_0 = arith.constant 0 : index
    %0 = vector.load %arg1[%c0, %c0_0] : memref<128x32xf32, #tpu.memory_space<vmem>>, vector<128x32xf32>
    %1 = arith.truncf %0 : vector<128x32xf32> to vector<128x32xbf16>
    %c0_1 = arith.constant 0 : index
    %c0_2 = arith.constant 0 : index
    %2 = vector.load %arg2[%c0_1, %c0_2] : memref<32x128xbf16, #tpu.memory_space<vmem>>, vector<32x128xbf16>
    %cst = arith.constant dense<0.000000e+00> : vector<128x128xf32>
    %3 = tpu.matmul %1, %2, %cst {dimension_numbers = #tpu.dot_dimension_numbers<[1], [0], [0], [1], [0, 0, 1, 1], [], []>} : vector<128x32xbf16>, vector<32x128xbf16>, vector<128x128xf32> -> vector<128x128xf32>
    %c0_3 = arith.constant 0 : index
    %c0_4 = arith.constant 0 : index
    %4 = vector.load %arg3[%c0_3, %c0_4] : memref<1x128xf32, #tpu.memory_space<vmem>>, vector<1x128xf32>
    %5 = vector.broadcast %4 : vector<1x128xf32> to vector<128x128xf32>
    %6 = arith.addf %3, %5 : vector<128x128xf32>
    %cst_5 = arith.constant 0.000000e+00 : f32
    %7 = vector.broadcast %cst_5 : f32 to vector<128x128xf32>
    %8 = arith.maximumf %6, %7 : vector<128x128xf32>
    %9 = arith.truncf %8 : vector<128x128xf32> to vector<128x128xbf16>
    %c0_6 = arith.constant 0 : index
    %c0_7 = arith.constant 0 : index
    %10 = vector.load %arg4[%c0_6, %c0_7] : memref<128x64xbf16, #tpu.memory_space<vmem>>, vector<128x64xbf16>
    %cst_8 = arith.constant dense<0.000000e+00> : vector<128x64xf32>
    %11 = tpu.matmul %9, %10, %cst_8 {dimension_numbers = #tpu.dot_dimension_numbers<[1], [0], [0], [1], [0, 0, 1, 1], [], []>} : vector<128x128xbf16>, vector<128x64xbf16>, vector<128x64xf32> -> vector<128x64xf32>
    %c0_9 = arith.constant 0 : index
    %c0_10 = arith.constant 0 : index
    %12 = vector.load %arg5[%c0_9, %c0_10] : memref<1x64xf32, #tpu.memory_space<vmem>>, vector<1x64xf32>
    %13 = vector.broadcast %12 : vector<1x64xf32> to vector<128x64xf32>
    %14 = arith.addf %11, %13 : vector<128x64xf32>
    %cst_11 = arith.constant 0.000000e+00 : f32
    %15 = vector.broadcast %cst_11 : f32 to vector<128x64xf32>
    %16 = arith.maximumf %14, %15 : vector<128x64xf32>
    %c0_12 = arith.constant 0 : index
    %c0_13 = arith.constant 0 : index
    %17 = vector.load %arg6[%c0_12, %c0_13] : memref<1x64xbf16, #tpu.memory_space<vmem>>, vector<1x64xbf16>
    %18 = arith.truncf %16 : vector<128x64xf32> to vector<128x64xbf16>
    %cst_14 = arith.constant dense<0.000000e+00> : vector<1x128xf32>
    %19 = tpu.matmul %17, %18, %cst_14 {dimension_numbers = #tpu.dot_dimension_numbers<[1], [1], [0], [0], [0, 0, 1, 0], [], []>} : vector<1x64xbf16>, vector<128x64xbf16>, vector<1x128xf32> -> vector<1x128xf32>
    %c0_15 = arith.constant 0 : index
    %c0_16 = arith.constant 0 : index
    %20 = memref.load %arg7[%c0_15, %c0_16] : memref<1x1xf32, #tpu.memory_space<smem>>
    %21 = vector.broadcast %20 : f32 to vector<1x128xf32>
    %22 = arith.addf %19, %21 : vector<1x128xf32>
    %cst_17 = arith.constant 0.000000e+00 : f32
    %23 = vector.broadcast %cst_17 : f32 to vector<1x128xf32>
    %24 = arith.subf %23, %22 : vector<1x128xf32>
    %25 = math.exp %24 : vector<1x128xf32>
    %cst_18 = arith.constant 1.000000e+00 : f32
    %26 = vector.broadcast %cst_18 : f32 to vector<1x128xf32>
    %27 = arith.addf %26, %25 : vector<1x128xf32>
    %28 = tpu.reciprocal %27 : vector<1x128xf32> -> vector<1x128xf32>
    %c0_19 = arith.constant 0 : index
    %c0_20 = arith.constant 0 : index
    %29 = vector.load %arg8[%c0_19, %c0_20] : memref<1x128xf32, #tpu.memory_space<vmem>>, vector<1x128xf32>
    tpu.vector_store %arg8[%c0_19, %c0_20], %28 {strides = array<i32>} : memref<1x128xf32, #tpu.memory_space<vmem>>, vector<1x128xf32>,
    return
  }
  func.func @transform_0(%arg0: i32) -> (i32, i32) {
    %c0_i32 = arith.constant 0 : i32
    %c0_i32_0 = arith.constant 0 : i32
    return %arg0, %c0_i32 : i32, i32
  }
  func.func @transform_1(%arg0: i32) -> (i32, i32) {
    %c0_i32 = arith.constant 0 : i32
    %c0_i32_0 = arith.constant 0 : i32
    %c0_i32_1 = arith.constant 0 : i32
    return %c0_i32, %c0_i32_0 : i32, i32
  }
  func.func @transform_2(%arg0: i32) -> (i32, i32) {
    %c0_i32 = arith.constant 0 : i32
    %c0_i32_0 = arith.constant 0 : i32
    %c0_i32_1 = arith.constant 0 : i32
    return %c0_i32, %c0_i32_0 : i32, i32
  }
  func.func @transform_3(%arg0: i32) -> (i32, i32) {
    %c0_i32 = arith.constant 0 : i32
    %c0_i32_0 = arith.constant 0 : i32
    %c0_i32_1 = arith.constant 0 : i32
    return %c0_i32, %c0_i32_0 : i32, i32
  }
  func.func @transform_4(%arg0: i32) -> (i32, i32) {
    %c0_i32 = arith.constant 0 : i32
    %c0_i32_0 = arith.constant 0 : i32
    %c0_i32_1 = arith.constant 0 : i32
    return %c0_i32, %c0_i32_0 : i32, i32
  }
  func.func @transform_5(%arg0: i32) -> (i32, i32) {
    %c0_i32 = arith.constant 0 : i32
    %c0_i32_0 = arith.constant 0 : i32
    %c0_i32_1 = arith.constant 0 : i32
    return %c0_i32, %c0_i32_0 : i32, i32
  }
  func.func @transform_6(%arg0: i32) -> (i32, i32) {
    %c0_i32 = arith.constant 0 : i32
    %c0_i32_0 = arith.constant 0 : i32
    %c0_i32_1 = arith.constant 0 : i32
    return %c0_i32, %c0_i32_0 : i32, i32
  }
  func.func @transform_7(%arg0: i32) -> (i32, i32) {
    %c0_i32 = arith.constant 0 : i32
    %c0_i32_0 = arith.constant 0 : i32
    return %c0_i32, %arg0 : i32, i32
  }
}

</mosaic_0001>

<llo_original>
// kernel: tpu_custom_call.1
$region0: #{tpu_custom_call.1}
  #allocation0 [shape = 'u32[]', space=smem, size = 0x4, offset = 0x4, fixed_abs, tag = 'smem constant byte address 0x4 - core index']
  #allocation1 [shape = 'u32[144,128]{1,0:T(1,128)}', space=vmem, size = 0x12000, scoped, tag = 'internal scratch']
  #allocation2 [shape = 'f32[1,1]{1,0:T(1,128)S(6)}', space=smem, size = 0x200, scoped, tag = 'scoped memory for tpu_custom_call.1']
  %s0 = inlined_call_operand.vmem [shape: f32[8,32], index: 0, kind: input, shape index: {}]
  %s1 = inlined_call_operand.vmem [shape: bf16[32,128], index: 1, kind: input, shape index: {}]
  %s2 = inlined_call_operand.vmem [shape: f32[1,128], index: 2, kind: input, shape index: {}]
  %s3 = inlined_call_operand.vmem [shape: bf16[128,64], index: 3, kind: input, shape index: {}]
  %s4 = inlined_call_operand.vmem [shape: f32[1,64], index: 4, kind: input, shape index: {}]
  %s5 = inlined_call_operand.vmem [shape: bf16[1,64], index: 5, kind: input, shape index: {}]
  %s6 = inlined_call_operand.<no memory space> [shape: f32[1,1], index: 6, kind: input, shape index: {}]
  %s7 = inlined_call_operand.hbm [shape: f32[1,128], index: 7, kind: output, shape index: {}]
  %s8 = sld [smem:[#allocation0]]
  $region38: #{tpu_custom_call.1} parent=0
    _
  %s10 = ssub.s32 1, %s8
  %s11 = scalar_select 0, %s10, %s8
  %12 = sst [smem:[#allocation2]] %s6
  $region1: #{tpu_custom_call.1} parent=0
    #allocation3 [shape = 'u8[512]{0}', space=vmem, size = 0x400, scoped, tag = 'output window, operand 0, single buffered']
    #allocation4 [shape = 's32[1]{0}', space=sflag, size = 0x4, scoped, tag = 'scoped memory for tpu_custom_call.1']
    %13 = vsyncpa [#allocation4], 0
    // Predicated region
    $region2: #{tpu_custom_call.1} parent=1 // pred_check
      _
    $region3: #{tpu_custom_call.1} parent=1 // pred_check_branch
      %15 = sbr.rel (0) target = $region5
    $region4: #{tpu_custom_call.1} parent=1 // pred_region
      _
    $region5: #{tpu_custom_call.1} parent=1 // pred_fallthru
      _
    // Predicated region
    $region6: #{tpu_custom_call.1} parent=1 // pred_check
      _
    $region7: #{tpu_custom_call.1} parent=1 // pred_check_branch
      %17 = sbr.rel (0) target = $region9
    $region8: #{tpu_custom_call.1} parent=1 // pred_region
      _
    $region9: #{tpu_custom_call.1} parent=1 // pred_fallthru
      _
    // Predicated region
    $region10: #{tpu_custom_call.1} parent=1 // pred_check
      _
    $region11: #{tpu_custom_call.1} parent=1 // pred_check_branch
      %19 = sbr.rel (0) target = $region13
    $region12: #{tpu_custom_call.1} parent=1 // pred_region
      _
    $region13: #{tpu_custom_call.1} parent=1 // pred_fallthru
      _
    // Predicated region
    $region14: #{tpu_custom_call.1} parent=1 // pred_check
      _
    $region15: #{tpu_custom_call.1} parent=1 // pred_check_branch
      %21 = sbr.rel (0) target = $region17
    $region16: #{tpu_custom_call.1} parent=1 // pred_region
      _
    $region17: #{tpu_custom_call.1} parent=1 // pred_fallthru
      _
    // Predicated region
    $region18: #{tpu_custom_call.1} parent=1 // pred_check
      _
    $region19: #{tpu_custom_call.1} parent=1 // pred_check_branch
      %23 = sbr.rel (0) target = $region21
    $region20: #{tpu_custom_call.1} parent=1 // pred_region
      _
    $region21: #{tpu_custom_call.1} parent=1 // pred_fallthru
      _
    // Predicated region
    $region22: #{tpu_custom_call.1} parent=1 // pred_check
      _
    $region23: #{tpu_custom_call.1} parent=1 // pred_check_branch
      %25 = sbr.rel (0) target = $region25
    $region24: #{tpu_custom_call.1} parent=1 // pred_region
      _
    $region25: #{tpu_custom_call.1} parent=1 // pred_fallthru
      _
    // Predicated region
    $region26: #{tpu_custom_call.1} parent=1 // pred_check
      _
    $region27: #{tpu_custom_call.1} parent=1 // pred_check_branch
      %27 = sbr.rel (0) target = $region29
    $region28: #{tpu_custom_call.1} parent=1 // pred_region
      _
    $region29: #{tpu_custom_call.1} parent=1 // pred_fallthru
      _
    %v29 = vld [vmem:[%s0] sm:$0xff]
    %v30 = vld [vmem:[%s0 + $0x8] sm:$0xff]
    %v31 = vld [vmem:[%s0 + $0x10] sm:$0xff]
    %v32 = vld [vmem:[%s0 + $0x18] sm:$0xff]
    %v33 = vld [vmem:[%s0 + $0x20] sm:$0xff]
    %v34 = vld [vmem:[%s0 + $0x28] sm:$0xff]
    %v35 = vld [vmem:[%s0 + $0x30] sm:$0xff]
    %v36 = vld [vmem:[%s0 + $0x38] sm:$0xff]
    %v37 = vld [vmem:[%s0 + $0x40] sm:$0xff]
    %v38 = vld [vmem:[%s0 + $0x48] sm:$0xff]
    %v39 = vld [vmem:[%s0 + $0x50] sm:$0xff]
    %v40 = vld [vmem:[%s0 + $0x58] sm:$0xff]
    %v41 = vld [vmem:[%s0 + $0x60] sm:$0xff]
    %v42 = vld [vmem:[%s0 + $0x68] sm:$0xff]
    %v43 = vld [vmem:[%s0 + $0x70] sm:$0xff]
    %v44 = vld [vmem:[%s0 + $0x78] sm:$0xff]
    %v45 = vpack.c.bf16 %v30, %v29
    %v46 = vpack.c.bf16 %v32, %v31
    %v47 = vpack.c.bf16 %v34, %v33
    %v48 = vpack.c.bf16 %v36, %v35
    %v49 = vpack.c.bf16 %v38, %v37
    %v50 = vpack.c.bf16 %v40, %v39
    %v51 = vpack.c.bf16 %v42, %v41
    %v52 = vpack.c.bf16 %v44, %v43
    %v53 = vld [vmem:[%s1] sm:$0xf]
    %v54 = vld [vmem:[%s1 + $0x4] sm:$0xf]
    %v55 = vld [vmem:[%s1 + $0x8] sm:$0xf]
    %v56 = vld [vmem:[%s1 + $0xc] sm:$0xf]
    %v57 = vld [vmem:[%s2] sm:$0x1]
    %v59 = vlaneseq
    %v60 = vshrl.u32 %v59, 7
    %v61 = vsub.s32 0, %v60
    %v62 = vrot.slane %v57, %v61
    %v68 = vunpack.c.l.b16 %v53
    %v69 = vunpack.c.l.b16 %v54
    %v70 = vunpack.c.l.b16 %v55
    %v71 = vunpack.c.l.b16 %v56
    %v72 = vpack.c.b16 %v69, %v68
    %v73 = vpack.c.b16 %v71, %v70
    %vm76 = vcmask 261120
    %v78 = vsel %vm76, %v45, 0
    %v81 = vsel %vm76, %v46, 0
    %v84 = vsel %vm76, %v47, 0
    %v87 = vsel %vm76, %v48, 0
    %v90 = vsel %vm76, %v49, 0
    %v93 = vsel %vm76, %v50, 0
    %v96 = vsel %vm76, %v51, 0
    %v99 = vsel %vm76, %v52, 0
    %101 = vmatprep.subr.bf16.mxu0 0
    %102 = vmatpush1.bf16.msra.mxu0 %v72
    %103 = vmatprep.subr.bf16.mxu0 0
    %104 = vmatpush1.bf16.msra.mxu0 %v73
    %105 = vmatprep.subr.bf16.mxu0 0
    %106 = vmatpush1.bf16.msra.mxu0 0
    %107 = vmatprep.subr.bf16.mxu0 0
    %108 = vmatpush1.bf16.msra.mxu0 0
    %109 = vmatprep.subr.bf16.mxu0 0
    %110 = vmatpush1.bf16.msra.mxu0 0
    %111 = vmatprep.subr.bf16.mxu0 0
    %112 = vmatpush1.bf16.msra.mxu0 0
    %113 = vmatprep.subr.bf16.mxu0 0
    %114 = vmatpush1.bf16.msra.mxu0 0
    %115 = vmatprep.subr.bf16.mxu0 0
    %116 = vmatpush1.bf16.msra.mxu0 0
    %117 = vmatprep.subr.bf16.mxu0 0
    %118 = vmatpush1.bf16.msra.mxu0 0
    %119 = vmatprep.subr.bf16.mxu0 0
    %120 = vmatpush1.bf16.msra.mxu0 0
    %121 = vmatprep.subr.bf16.mxu0 0
    %122 = vmatpush1.bf16.msra.mxu0 0
    %123 = vmatprep.subr.bf16.mxu0 0
    %124 = vmatpush1.bf16.msra.mxu0 0
    %125 = vmatprep.subr.bf16.mxu0 0
    %126 = vmatpush1.bf16.msra.mxu0 0
    %127 = vmatprep.subr.bf16.mxu0 0
    %128 = vmatpush1.bf16.msra.mxu0 0
    %129 = vmatprep.subr.bf16.mxu0 0
    %130 = vmatpush1.bf16.msra.mxu0 0
    %131 = vmatprep.subr.bf16.mxu0 0
    %132 = vmatpush1.bf16.msra.mxu0 0
    %133 = vmatprep.mubr.bf16.mxu0 0
    %134 = vmatmul.mubr.bf16.gmra.mrb[0].mxu0 %v78
    %v135 = vpop.f32.mrb[0].mxu0
    %v136 = vadd.f32 %v62, %v135
    %v137 = vpop.f32.mrb[0].mxu0
    %v138 = vpop.f32.mrb[0].mxu0
    %v139 = vadd.f32 %v62, %v138
    %v140 = vpop.f32.mrb[0].mxu0
    %141 = vmatprep.mubr.bf16.mxu0 0
    %142 = vmatmul.mubr.bf16.gmra.mrb[0].mxu0 %v81
    %v143 = vpop.f32.mrb[0].mxu0
    %v144 = vadd.f32 %v62, %v143
    %v145 = vpop.f32.mrb[0].mxu0
    %v146 = vpop.f32.mrb[0].mxu0
    %v147 = vadd.f32 %v62, %v146
    %v148 = vpop.f32.mrb[0].mxu0
    %149 = vmatprep.mubr.bf16.mxu0 0
    %150 = vmatmul.mubr.bf16.gmra.mrb[0].mxu0 %v84
    %v151 = vpop.f32.mrb[0].mxu0
    %v152 = vadd.f32 %v62, %v151
    %v153 = vpop.f32.mrb[0].mxu0
    %v154 = vpop.f32.mrb[0].mxu0
    %v155 = vadd.f32 %v62, %v154
    %v156 = vpop.f32.mrb[0].mxu0
    %157 = vmatprep.mubr.bf16.mxu0 0
    %158 = vmatmul.mubr.bf16.gmra.mrb[0].mxu0 %v87
    %v159 = vpop.f32.mrb[0].mxu0
    %v160 = vadd.f32 %v62, %v159
    %v161 = vpop.f32.mrb[0].mxu0
    %v162 = vpop.f32.mrb[0].mxu0
    %v163 = vadd.f32 %v62, %v162
    %v164 = vpop.f32.mrb[0].mxu0
    %165 = vmatprep.mubr.bf16.mxu0 0
    %166 = vmatmul.mubr.bf16.gmra.mrb[0].mxu0 %v90
    %v167 = vpop.f32.mrb[0].mxu0
    %v168 = vadd.f32 %v62, %v167
    %v169 = vpop.f32.mrb[0].mxu0
    %v170 = vpop.f32.mrb[0].mxu0
    %v171 = vadd.f32 %v62, %v170
    %v172 = vpop.f32.mrb[0].mxu0
    %173 = vmatprep.mubr.bf16.mxu0 0
    %174 = vmatmul.mubr.bf16.gmra.mrb[0].mxu0 %v93
    %v175 = vpop.f32.mrb[0].mxu0
    %v176 = vadd.f32 %v62, %v175
    %v177 = vpop.f32.mrb[0].mxu0
    %v178 = vpop.f32.mrb[0].mxu0
    %v179 = vadd.f32 %v62, %v178
    %v180 = vpop.f32.mrb[0].mxu0
    %181 = vmatprep.mubr.bf16.mxu0 0
    %182 = vmatmul.mubr.bf16.gmra.mrb[0].mxu0 %v96
    %v183 = vpop.f32.mrb[0].mxu0
    %v184 = vadd.f32 %v62, %v183
    %v185 = vpop.f32.mrb[0].mxu0
    %v186 = vpop.f32.mrb[0].mxu0
    %v187 = vadd.f32 %v62, %v186
    %v188 = vpop.f32.mrb[0].mxu0
    %189 = vmatprep.mubr.bf16.mxu0 0
    %190 = vmatmul.mubr.bf16.gmra.mrb[0].mxu0 %v99
    %v191 = vpop.f32.mrb[0].mxu0
    %v192 = vadd.f32 %v62, %v191
    %v193 = vpop.f32.mrb[0].mxu0
    %v194 = vpop.f32.mrb[0].mxu0
    %v195 = vadd.f32 %v62, %v194
    %v196 = vpop.f32.mrb[0].mxu0
    %197 = vdwg.mxu0
    %v198 = vmax.f32 %v136, 0.0
    %v199 = vmax.f32 %v139, 0.0
    %v200 = vmax.f32 %v144, 0.0
    %v201 = vmax.f32 %v147, 0.0
    %v202 = vmax.f32 %v152, 0.0
    %v203 = vmax.f32 %v155, 0.0
    %v204 = vmax.f32 %v160, 0.0
    %v205 = vmax.f32 %v163, 0.0
    %v206 = vmax.f32 %v168, 0.0
    %v207 = vmax.f32 %v171, 0.0
    %v208 = vmax.f32 %v176, 0.0
    %v209 = vmax.f32 %v179, 0.0
    %v210 = vmax.f32 %v184, 0.0
    %v211 = vmax.f32 %v187, 0.0
    %v212 = vmax.f32 %v192, 0.0
    %v213 = vmax.f32 %v195, 0.0
    %v214 = vpack.c.bf16 %v199, %v198
    %v215 = vpack.c.bf16 %v201, %v200
    %v216 = vpack.c.bf16 %v203, %v202
    %v217 = vpack.c.bf16 %v205, %v204
    %v218 = vpack.c.bf16 %v207, %v206
    %v219 = vpack.c.bf16 %v209, %v208
    %v220 = vpack.c.bf16 %v211, %v210
    %v221 = vpack.c.bf16 %v213, %v212
    %v222 = vld [vmem:[%s3] sm:$0xf]
    %v223 = vld [vmem:[%s3 + $0x4] sm:$0xf]
    %v224 = vld [vmem:[%s3 + $0x8] sm:$0xf]
    %v225 = vld [vmem:[%s3 + $0xc] sm:$0xf]
    %v226 = vld [vmem:[%s3 + $0x10] sm:$0xf]
    %v227 = vld [vmem:[%s3 + $0x14] sm:$0xf]
    %v228 = vld [vmem:[%s3 + $0x18] sm:$0xf]
    %v229 = vld [vmem:[%s3 + $0x1c] sm:$0xf]
    %v230 = vld [vmem:[%s3 + $0x20] sm:$0xf]
    %v231 = vld [vmem:[%s3 + $0x24] sm:$0xf]
    %v232 = vld [vmem:[%s3 + $0x28] sm:$0xf]
    %v233 = vld [vmem:[%s3 + $0x2c] sm:$0xf]
    %v234 = vld [vmem:[%s3 + $0x30] sm:$0xf]
    %v235 = vld [vmem:[%s3 + $0x34] sm:$0xf]
    %v236 = vld [vmem:[%s3 + $0x38] sm:$0xf]
    %v237 = vld [vmem:[%s3 + $0x3c] sm:$0xf]
    %v238 = vld [vmem:[%s4] sm:$0x1]
    %v240 = vlaneseq
    %v241 = vshrl.u32 %v240, 7
    %v242 = vsub.s32 0, %v241
    %v243 = vrot.slane %v238, %v242
    %v261 = vunpack.c.l.b16 %v222
    %v262 = vunpack.c.l.b16 %v223
    %v263 = vunpack.c.l.b16 %v224
    %v264 = vunpack.c.l.b16 %v225
    %v265 = vunpack.c.l.b16 %v226
    %v266 = vunpack.c.l.b16 %v227
    %v267 = vunpack.c.l.b16 %v228
    %v268 = vunpack.c.l.b16 %v229
    %v269 = vunpack.c.l.b16 %v230
    %v270 = vunpack.c.l.b16 %v231
    %v271 = vunpack.c.l.b16 %v232
    %v272 = vunpack.c.l.b16 %v233
    %v273 = vunpack.c.l.b16 %v234
    %v274 = vunpack.c.l.b16 %v235
    %v275 = vunpack.c.l.b16 %v236
    %v276 = vunpack.c.l.b16 %v237
    %v277 = vpack.c.b16 %v262, %v261
    %v278 = vpack.c.b16 %v264, %v263
    %v279 = vpack.c.b16 %v266, %v265
    %v280 = vpack.c.b16 %v268, %v267
    %v281 = vpack.c.b16 %v270, %v269
    %v282 = vpack.c.b16 %v272, %v271
    %v283 = vpack.c.b16 %v274, %v273
    %v284 = vpack.c.b16 %v276, %v275
    %293 = vmatprep.subr.bf16.mxu0 0
    %294 = vmatpush1.bf16.msra.mxu0 %v277
    %295 = vmatprep.subr.bf16.mxu0 0
    %296 = vmatpush1.bf16.msra.mxu0 %v278
    %297 = vmatprep.subr.bf16.mxu0 0
    %298 = vmatpush1.bf16.msra.mxu0 %v279
    %299 = vmatprep.subr.bf16.mxu0 0
    %300 = vmatpush1.bf16.msra.mxu0 %v280
    %301 = vmatprep.subr.bf16.mxu0 0
    %302 = vmatpush1.bf16.msra.mxu0 %v281
    %303 = vmatprep.subr.bf16.mxu0 0
    %304 = vmatpush1.bf16.msra.mxu0 %v282
    %305 = vmatprep.subr.bf16.mxu0 0
    %306 = vmatpush1.bf16.msra.mxu0 %v283
    %307 = vmatprep.subr.bf16.mxu0 0
    %308 = vmatpush1.bf16.msra.mxu0 %v284
    %309 = vmatprep.subr.bf16.mxu0 0
    %310 = vmatpush1.bf16.msra.mxu0 0
    %311 = vmatprep.subr.bf16.mxu0 0
    %312 = vmatpush1.bf16.msra.mxu0 0
    %313 = vmatprep.subr.bf16.mxu0 0
    %314 = vmatpush1.bf16.msra.mxu0 0
    %315 = vmatprep.subr.bf16.mxu0 0
    %316 = vmatpush1.bf16.msra.mxu0 0
    %317 = vmatprep.subr.bf16.mxu0 0
    %318 = vmatpush1.bf16.msra.mxu0 0
    %319 = vmatprep.subr.bf16.mxu0 0
    %320 = vmatpush1.bf16.msra.mxu0 0
    %321 = vmatprep.subr.bf16.mxu0 0
    %322 = vmatpush1.bf16.msra.mxu0 0
    %323 = vmatprep.subr.bf16.mxu0 0
    %324 = vmatpush1.bf16.msra.mxu0 0
    %325 = vmatprep.mubr.bf16.mxu0 0
    %326 = vmatmul.mubr.bf16.gmra.mrb[0].mxu0 %v214
    %v327 = vpop.f32.mrb[0].mxu0
    %v328 = vadd.f32 %v243, %v327
    %v329 = vpop.f32.mrb[0].mxu0
    %v330 = vpop.f32.mrb[0].mxu0
    %v331 = vadd.f32 %v243, %v330
    %v332 = vpop.f32.mrb[0].mxu0
    %333 = vmatprep.mubr.bf16.mxu0 0
    %334 = vmatmul.mubr.bf16.gmra.mrb[0].mxu0 %v215
    %v335 = vpop.f32.mrb[0].mxu0
    %v336 = vadd.f32 %v243, %v335
    %v337 = vpop.f32.mrb[0].mxu0
    %v338 = vpop.f32.mrb[0].mxu0
    %v339 = vadd.f32 %v243, %v338
    %v340 = vpop.f32.mrb[0].mxu0
    %341 = vmatprep.mubr.bf16.mxu0 0
    %342 = vmatmul.mubr.bf16.gmra.mrb[0].mxu0 %v216
    %v343 = vpop.f32.mrb[0].mxu0
    %v344 = vadd.f32 %v243, %v343
    %v345 = vpop.f32.mrb[0].mxu0
    %v346 = vpop.f32.mrb[0].mxu0
    %v347 = vadd.f32 %v243, %v346
    %v348 = vpop.f32.mrb[0].mxu0
    %349 = vmatprep.mubr.bf16.mxu0 0
    %350 = vmatmul.mubr.bf16.gmra.mrb[0].mxu0 %v217
    %v351 = vpop.f32.mrb[0].mxu0
    %v352 = vadd.f32 %v243, %v351
    %v353 = vpop.f32.mrb[0].mxu0
    %v354 = vpop.f32.mrb[0].mxu0
    %v355 = vadd.f32 %v243, %v354
    %v356 = vpop.f32.mrb[0].mxu0
    %357 = vmatprep.mubr.bf16.mxu0 0
    %358 = vmatmul.mubr.bf16.gmra.mrb[0].mxu0 %v218
    %v359 = vpop.f32.mrb[0].mxu0
    %v360 = vadd.f32 %v243, %v359
    %v361 = vpop.f32.mrb[0].mxu0
    %v362 = vpop.f32.mrb[0].mxu0
    %v363 = vadd.f32 %v243, %v362
    %v364 = vpop.f32.mrb[0].mxu0
    %365 = vmatprep.mubr.bf16.mxu0 0
    %366 = vmatmul.mubr.bf16.gmra.mrb[0].mxu0 %v219
    %v367 = vpop.f32.mrb[0].mxu0
    %v368 = vadd.f32 %v243, %v367
    %v369 = vpop.f32.mrb[0].mxu0
    %v370 = vpop.f32.mrb[0].mxu0
    %v371 = vadd.f32 %v243, %v370
    %v372 = vpop.f32.mrb[0].mxu0
    %373 = vmatprep.mubr.bf16.mxu0 0
    %374 = vmatmul.mubr.bf16.gmra.mrb[0].mxu0 %v220
    %v375 = vpop.f32.mrb[0].mxu0
    %v376 = vadd.f32 %v243, %v375
    %v377 = vpop.f32.mrb[0].mxu0
    %v378 = vpop.f32.mrb[0].mxu0
    %v379 = vadd.f32 %v243, %v378
    %v380 = vpop.f32.mrb[0].mxu0
    %381 = vmatprep.mubr.bf16.mxu0 0
    %382 = vmatmul.mubr.bf16.gmra.mrb[0].mxu0 %v221
    %v383 = vpop.f32.mrb[0].mxu0
    %v384 = vadd.f32 %v243, %v383
    %v385 = vpop.f32.mrb[0].mxu0
    %v386 = vpop.f32.mrb[0].mxu0
    %v387 = vadd.f32 %v243, %v386
    %v388 = vpop.f32.mrb[0].mxu0
    %389 = vdwg.mxu0
    %v390 = vmax.f32 %v328, 0.0
    %v391 = vmax.f32 %v331, 0.0
    %v392 = vmax.f32 %v336, 0.0
    %v393 = vmax.f32 %v339, 0.0
    %v394 = vmax.f32 %v344, 0.0
    %v395 = vmax.f32 %v347, 0.0
    %v396 = vmax.f32 %v352, 0.0
    %v397 = vmax.f32 %v355, 0.0
    %v398 = vmax.f32 %v360, 0.0
    %v399 = vmax.f32 %v363, 0.0
    %v400 = vmax.f32 %v368, 0.0
    %v401 = vmax.f32 %v371, 0.0
    %v402 = vmax.f32 %v376, 0.0
    %v403 = vmax.f32 %v379, 0.0
    %v404 = vmax.f32 %v384, 0.0
    %v405 = vmax.f32 %v387, 0.0
    %v406 = vld [vmem:[%s5] sm:$0x1]
    %v407 = vpack.c.bf16 %v391, %v390
    %v408 = vpack.c.bf16 %v393, %v392
    %v409 = vpack.c.bf16 %v395, %v394
    %v410 = vpack.c.bf16 %v397, %v396
    %v411 = vpack.c.bf16 %v399, %v398
    %v412 = vpack.c.bf16 %v401, %v400
    %v413 = vpack.c.bf16 %v403, %v402
    %v414 = vpack.c.bf16 %v405, %v404
    %s415 = sld [smem:[#allocation2]]
    %v416 = vstv %s415
    %vm417 = vcmask 523264
    %v419 = vsel %vm417, %v406, 0
    %v422 = vsel %vm417, %v407, 0
    %v425 = vsel %vm417, %v408, 0
    %v428 = vsel %vm417, %v409, 0
    %v431 = vsel %vm417, %v410, 0
    %v434 = vsel %vm417, %v411, 0
    %v437 = vsel %vm417, %v412, 0
    %v440 = vsel %vm417, %v413, 0
    %v443 = vsel %vm417, %v414, 0
    %445 = vmatprep.subr.bf16.mxu0 0
    %446 = vmatpush1.bf16.xpose.msra.mxu0 %v422
    %447 = vmatprep.subr.bf16.mxu0 0
    %448 = vmatpush1.bf16.xpose.msra.mxu0 %v425
    %449 = vmatprep.subr.bf16.mxu0 0
    %450 = vmatpush1.bf16.xpose.msra.mxu0 %v428
    %451 = vmatprep.subr.bf16.mxu0 0
    %452 = vmatpush1.bf16.xpose.msra.mxu0 %v431
    %453 = vmatprep.subr.bf16.mxu0 0
    %454 = vmatpush1.bf16.xpose.msra.mxu0 %v434
    %455 = vmatprep.subr.bf16.mxu0 0
    %456 = vmatpush1.bf16.xpose.msra.mxu0 %v437
    %457 = vmatprep.subr.bf16.mxu0 0
    %458 = vmatpush1.bf16.xpose.msra.mxu0 %v440
    %459 = vmatprep.subr.bf16.mxu0 0
    %460 = vmatpush1.bf16.xpose.msra.mxu0 %v443
    %461 = vmatprep.subr.bf16.mxu0 0
    %462 = vmatpush1.bf16.xpose.msra.mxu0 0
    %463 = vmatprep.subr.bf16.mxu0 0
    %464 = vmatpush1.bf16.xpose.msra.mxu0 0
    %465 = vmatprep.subr.bf16.mxu0 0
    %466 = vmatpush1.bf16.xpose.msra.mxu0 0
    %467 = vmatprep.subr.bf16.mxu0 0
    %468 = vmatpush1.bf16.xpose.msra.mxu0 0
    %469 = vmatprep.subr.bf16.mxu0 0
    %470 = vmatpush1.bf16.xpose.msra.mxu0 0
    %471 = vmatprep.subr.bf16.mxu0 0
    %472 = vmatpush1.bf16.xpose.msra.mxu0 0
    %473 = vmatprep.subr.bf16.mxu0 0
    %474 = vmatpush1.bf16.xpose.msra.mxu0 0
    %475 = vmatprep.subr.bf16.mxu0 0
    %476 = vmatpush1.bf16.xpose.msra.mxu0 0
    %477 = vmatprep.mubr.bf16.mxu0 0
    %478 = vmatmul.mubr.bf16.gmra.mrb[0].mxu0 %v419
    %v479 = vpop.f32.mrb[0].mxu0
    %v480 = vadd.f32 %v416, %v479
    %v481 = vpop.f32.mrb[0].mxu0
    %v482 = vpop.f32.mrb[0].mxu0
    %v483 = vpop.f32.mrb[0].mxu0
    %484 = vdwg.mxu0
    %v485 = vsub.f32 0.0, %v480
    %v486 = vmul.f32 %v485, 1.442695
    %v487 = vpow.pop %v486
    %v488 = vadd.f32 %v487, 1.0
    %v489 = vrcp.pop %v488
    %490 = vst [vmem:[#allocation3] sm:$0x1] %v489
    // Predicated region
    $region30: #{tpu_custom_call.1} parent=1 // pred_check
      _
    $region31: #{tpu_custom_call.1} parent=1 // pred_check_branch
      %492 = sbr.rel (0) target = $region33
    $region32: #{tpu_custom_call.1} parent=1 // pred_region
      %s494 = ssub.s32 16, 16
      %495 = vsyncadd [#allocation4], %s494
      %s497 = sshll.u32 [#allocation3], 4
      %s498 = int_to_ptr.vmem [resolvable:$true] %s497
      %500 = dma.vmem_to_hbm [thread:$0]  %s498, 16, %s7, [#allocation4]
    $region33: #{tpu_custom_call.1} parent=1 // pred_fallthru
      _
    // Predicated region
    $region34: #{tpu_custom_call.1} parent=1 // pred_check
      _
    $region35: #{tpu_custom_call.1} parent=1 // pred_check_branch
      %502 = sbr.rel (0) target = $region37
    $region36: #{tpu_custom_call.1} parent=1 // pred_region
      %503 = dma.done [#allocation4], 16
    $region37: #{tpu_custom_call.1} parent=1 // pred_fallthru
      _
    %504 = vsyncpa [#allocation4], 1

</llo_original>
